<compile_context>
chip_gen: v7x
topology: tpu7x:2x2x1
jax: 0.10.0
libtpu: 0.0.40
codegen_flags: <defaults>
</compile_context>

<pallas_src>
import jax
import jax.numpy as jnp
from jax.experimental import pallas as pl
from jax.experimental.pallas import tpu as pltpu


def _round_up(x, m):
    return ((x + m - 1) // m) * m


def mlp_kernel(xp_ref, w1_ref, b1_ref, w2t_ref, b2_ref, o_ref):
    """One batch tile.

    xp_ref : (tile_rows, K)        lane-packed input rows, K = pack*in_dim
    w1_ref : (K, pack*hidden)      block-diagonal fc1 weight (resident)
    b1_ref : (1, pack*hidden)      tiled fc1 bias (resident)
    w2t_ref: (pack, pack*hidden)   block-diagonal fc2 weight, transposed (resident)
    b2_ref : (1, 1)                fc2 bias scalar (SMEM)
    o_ref  : (1, pack, tile_rows)  lane-dense output block
    """
    # fc1 on the MXU, f32 accumulation.
    h = jnp.dot(xp_ref[...], w1_ref[...], preferred_element_type=jnp.float32)
    h = jnp.maximum(h + b1_ref[...], 0.0)                 # bias + ReLU (VPU)
    # fc2: (pack, PH) x (tile_rows, PH)^T on the (otherwise ~idle) MXU, so the
    # batch lands on the lane axis -> unmasked, lane-dense output stores.
    out = jax.lax.dot_general(
        w2t_ref[...], h,
        dimension_numbers=(((1,), (1,)), ((), ())),
        preferred_element_type=jnp.float32)                # (pack, tile_rows)
    o_ref[...] = (out + b2_ref[0, 0])[None, :, :].astype(o_ref.dtype)


def my_model_forward(x, w1, b1, w2, b2, *, tile_rows=4096):
    """MyModel forward. x: (B, in_dim) f32 -> (B,) f32 (matches squeeze(1)).

    tile_rows is the per-grid-step tile in *packed* rows (tile_rows * pack
    original batch rows per step); default 4096 keeps ~2 MiB of x per DMA
    (~10-15 MiB total VMEM) -- raise towards 8192-16384 on v6e if desired.
    """
    B, in_dim = x.shape
    hidden = w1.shape[1]

    # --- lane-pack the narrow feature dim ------------------------------------
    pack = 1
    if 0 < in_dim < 128 and 128 % in_dim == 0:
        cand = 128 // in_dim
        if B % cand == 0:
            pack = cand                       # e.g. in_dim=32 -> pack=4, K=128

    n_rows = B // pack                        # packed rows
    K = pack * in_dim
    PH = pack * hidden

    xp = x.reshape(n_rows, K)                 # free (contiguous row-major) view

    if pack > 1:
        eye = jnp.eye(pack, dtype=jnp.float32)
        w1_p = jnp.kron(eye, w1.astype(jnp.float32))              # (K, PH)
        b1_p = jnp.tile(b1.reshape(1, hidden).astype(jnp.float32), (1, pack))
        w2t_p = jnp.kron(eye, w2.reshape(1, hidden).astype(jnp.float32))  # (pack, PH)
    else:
        w1_p = w1.astype(jnp.float32)
        b1_p = b1.reshape(1, hidden).astype(jnp.float32)
        w2t_p = w2.reshape(1, hidden).astype(jnp.float32)
    b2_s = b2.reshape(1, 1).astype(jnp.float32)                   # scalar -> SMEM

    # --- batch tiling ---------------------------------------------------------
    # Large tiles amortize per-grid-step overhead.  Multiple of 128 keeps the
    # output stores unmasked and the x block sublane-aligned.  Small batches
    # use a single exact block (block dims == full array dims, always legal).
    tile_rows = int(tile_rows)
    if n_rows <= tile_rows:
        tile_rows = max(1, n_rows)
        n_tiles = 1
    else:
        tile_rows = max(128, (tile_rows // 128) * 128)
        n_tiles = pl.cdiv(n_rows, tile_rows)
    # The last grid step may overhang n_rows: Pallas clamps the input DMA and
    # the garbage rows it computes are sliced away below (no jnp.pad HBM pass).

    flops = 2 * n_tiles * tile_rows * (K * PH + PH * pack) + 2 * n_tiles * tile_rows * PH
    bytes_accessed = (
        xp.size * xp.dtype.itemsize
        + w1_p.size * 4 + b1_p.size * 4 + w2t_p.size * 4 + 4
        + n_tiles * pack * tile_rows * 4
    )

    out3 = pl.pallas_call(
        mlp_kernel,
        out_shape=jax.ShapeDtypeStruct((n_tiles, pack, tile_rows), jnp.float32),
        grid=(n_tiles,),
        in_specs=[
            # x tile (streamed; add pipeline_mode=pl.Buffered(3) here only if
            # profiling shows exposed DMA wait at large tile sizes)
            pl.BlockSpec((tile_rows, K), lambda i: (i, 0)),
            pl.BlockSpec((K, PH), lambda i: (0, 0)),         # w1 (resident)
            pl.BlockSpec((1, PH), lambda i: (0, 0)),         # b1 (resident)
            pl.BlockSpec((pack, PH), lambda i: (0, 0)),      # w2^T (resident)
            pl.BlockSpec(memory_space=pltpu.MemorySpace.SMEM),  # b2 scalar
        ],
        out_specs=pl.BlockSpec((1, pack, tile_rows), lambda i: (i, 0, 0)),
        compiler_params=pltpu.CompilerParams(
            dimension_semantics=("parallel",),
            vmem_limit_bytes=48 * 1024 * 1024,
        ),
        cost_estimate=pl.CostEstimate(
            flops=flops, transcendentals=0, bytes_accessed=bytes_accessed),
    )(xp, w1_p, b1_p, w2t_p, b2_s)

    # out3[t, k, r] == model(x[(t*tile_rows + r)*pack + k]); tiny layout fixup.
    if pack > 1:
        flat = jnp.transpose(out3, (0, 2, 1)).reshape(-1)
    else:
        flat = out3.reshape(-1)
    return flat[:B]


def init_params(key, in_dim, hidden=64, out_dim=1):
    """Deterministic init mimicking nn.Linear's U(-1/sqrt(fan_in), 1/sqrt(fan_in))."""
    k1, k2, k3, k4 = jax.random.split(key, 4)
    bound1 = 1.0 / jnp.sqrt(in_dim)
    bound2 = 1.0 / jnp.sqrt(hidden)
    # Stored already transposed: (in_features, out_features)
    w1 = jax.random.uniform(k1, (in_dim, hidden), jnp.float32, -bound1, bound1)
    b1 = jax.random.uniform(k2, (1, hidden), jnp.float32, -bound1, bound1)
    w2 = jax.random.uniform(k3, (hidden, out_dim), jnp.float32, -bound2, bound2)
    b2 = jax.random.uniform(k4, (1, out_dim), jnp.float32, -bound2, bound2)
    return w1, b1, w2, b2


def _ref_forward(x, w1, b1, w2, b2):
    h = jnp.maximum(x @ w1 + b1.reshape(1, -1), 0.0)
    return (h @ w2 + b2.reshape(1, -1))[:, 0]


if __name__ == "__main__":
    key = jax.random.PRNGKey(0)
    k_p, k1, k2, k3, k4 = jax.random.split(key, 5)

    IN_DIM = 32
    w1, b1, w2, b2 = init_params(k_p, IN_DIM)

    def check(x, name, **kw):
        out = jax.block_until_ready(my_model_forward(x, w1, b1, w2, b2, **kw))
        ref = _ref_forward(x, w1, b1, w2, b2)
        assert out.shape == (x.shape[0],), name
        assert jnp.allclose(out, ref, atol=1e-4, rtol=1e-4), name

    # tiny batch, lane-packed path (B % 4 == 0), single exact block
    check(jax.random.normal(k1, (8, IN_DIM), jnp.float32), "B=8 packed")
    # ragged packed-row count (n_rows = 75), single exact block
    check(jax.random.normal(k2, (300, IN_DIM), jnp.float32), "B=300 packed")
    # B not a multiple of the pack factor -> generic (unpacked) fallback path
    check(jax.random.normal(k3, (258, IN_DIM), jnp.float32), "B=258 fallback")
    # multi-tile grid with an overhanging last block (no jnp.pad HBM pass)
    check(jax.random.normal(k4, (1000, IN_DIM), jnp.float32),
          "B=1000 multi-tile", tile_rows=128)

    print("KERNEL_OK")
</pallas_src>

<mosaic_0001>
module attributes {stable_mosaic.version = 11 : i64} {
  func.func @mlp_kernel(%arg0: i32, %arg1: memref<2x128xf32, #tpu.memory_space<vmem>>, %arg2: memref<128x256xf32, #tpu.memory_space<vmem>>, %arg3: memref<1x256xf32, #tpu.memory_space<vmem>>, %arg4: memref<4x256xf32, #tpu.memory_space<vmem>>, %arg5: memref<1x1xf32, #tpu.memory_space<smem>>, %arg6: memref<1x4x2xf32, #tpu.memory_space<vmem>>) attributes {dimension_semantics = [#tpu.dimension_semantics<parallel>], iteration_bounds = array<i64: 1>, scalar_prefetch = 0 : i64, scratch_operands = 0 : i64, tpu.core_type = #tpu.core_type<tc>, window_params = [{transform_indices = @transform_0, window_bounds = array<i64: 2, 128>}, {pipeline_mode = #tpu.pipeline_mode<synchronous>, transform_indices = @transform_1, window_bounds = array<i64: 128, 256>}, {pipeline_mode = #tpu.pipeline_mode<synchronous>, transform_indices = @transform_2, window_bounds = array<i64: 1, 256>}, {pipeline_mode = #tpu.pipeline_mode<synchronous>, transform_indices = @transform_3, window_bounds = array<i64: 4, 256>}, {transform_indices = @transform_4, window_bounds = array<i64: 1, 1>}, {transform_indices = @transform_5, window_bounds = array<i64: 1, 4, 2>}]} {
    %c0 = arith.constant 0 : index
    %c0_0 = arith.constant 0 : index
    %0 = vector.load %arg1[%c0, %c0_0] : memref<2x128xf32, #tpu.memory_space<vmem>>, vector<2x128xf32>
    %c0_1 = arith.constant 0 : index
    %c0_2 = arith.constant 0 : index
    %1 = vector.load %arg2[%c0_1, %c0_2] : memref<128x256xf32, #tpu.memory_space<vmem>>, vector<128x256xf32>
    %cst = arith.constant dense<0.000000e+00> : vector<2x256xf32>
    %2 = tpu.matmul %0, %1, %cst {dimension_numbers = #tpu.dot_dimension_numbers<[1], [0], [0], [1], [0, 0, 1, 1], [], []>} : vector<2x128xf32>, vector<128x256xf32>, vector<2x256xf32> -> vector<2x256xf32>
    %c0_3 = arith.constant 0 : index
    %c0_4 = arith.constant 0 : index
    %3 = vector.load %arg3[%c0_3, %c0_4] : memref<1x256xf32, #tpu.memory_space<vmem>>, vector<1x256xf32>
    %4 = vector.broadcast %3 : vector<1x256xf32> to vector<2x256xf32>
    %5 = arith.addf %2, %4 : vector<2x256xf32>
    %cst_5 = arith.constant 0.000000e+00 : f32
    %6 = vector.broadcast %cst_5 : f32 to vector<2x256xf32>
    %7 = arith.maximumf %5, %6 : vector<2x256xf32>
    %c0_6 = arith.constant 0 : index
    %c0_7 = arith.constant 0 : index
    %8 = vector.load %arg4[%c0_6, %c0_7] : memref<4x256xf32, #tpu.memory_space<vmem>>, vector<4x256xf32>
    %cst_8 = arith.constant dense<0.000000e+00> : vector<4x2xf32>
    %9 = tpu.matmul %8, %7, %cst_8 {dimension_numbers = #tpu.dot_dimension_numbers<[1], [1], [0], [0], [0, 0, 1, 0], [], []>} : vector<4x256xf32>, vector<2x256xf32>, vector<4x2xf32> -> vector<4x2xf32>
    %c0_9 = arith.constant 0 : index
    %c0_10 = arith.constant 0 : index
    %10 = memref.load %arg5[%c0_9, %c0_10] : memref<1x1xf32, #tpu.memory_space<smem>>
    %11 = vector.broadcast %10 : f32 to vector<4x2xf32>
    %12 = arith.addf %9, %11 : vector<4x2xf32>
    %13 = vector.shape_cast %12 : vector<4x2xf32> to vector<1x4x2xf32>
    %c0_11 = arith.constant 0 : index
    %c0_12 = arith.constant 0 : index
    %c0_13 = arith.constant 0 : index
    %14 = vector.load %arg6[%c0_11, %c0_12, %c0_13] : memref<1x4x2xf32, #tpu.memory_space<vmem>>, vector<1x4x2xf32>
    tpu.vector_store %arg6[%c0_11, %c0_12, %c0_13], %13 {strides = array<i32>} : memref<1x4x2xf32, #tpu.memory_space<vmem>>, vector<1x4x2xf32>,
    return
  }
  func.func @transform_0(%arg0: i32) -> (i32, i32) {
    %c0_i32 = arith.constant 0 : i32
    %c0_i32_0 = arith.constant 0 : i32
    return %arg0, %c0_i32 : i32, i32
  }
  func.func @transform_1(%arg0: i32) -> (i32, i32) {
    %c0_i32 = arith.constant 0 : i32
    %c0_i32_0 = arith.constant 0 : i32
    %c0_i32_1 = arith.constant 0 : i32
    return %c0_i32, %c0_i32_0 : i32, i32
  }
  func.func @transform_2(%arg0: i32) -> (i32, i32) {
    %c0_i32 = arith.constant 0 : i32
    %c0_i32_0 = arith.constant 0 : i32
    %c0_i32_1 = arith.constant 0 : i32
    return %c0_i32, %c0_i32_0 : i32, i32
  }
  func.func @transform_3(%arg0: i32) -> (i32, i32) {
    %c0_i32 = arith.constant 0 : i32
    %c0_i32_0 = arith.constant 0 : i32
    %c0_i32_1 = arith.constant 0 : i32
    return %c0_i32, %c0_i32_0 : i32, i32
  }
  func.func @transform_4(%arg0: i32) -> (i32, i32) {
    %c0_i32 = arith.constant 0 : i32
    %c0_i32_0 = arith.constant 0 : i32
    %c0_i32_1 = arith.constant 0 : i32
    return %c0_i32, %c0_i32_0 : i32, i32
  }
  func.func @transform_5(%arg0: i32) -> (i32, i32, i32) {
    %c0_i32 = arith.constant 0 : i32
    %c0_i32_0 = arith.constant 0 : i32
    %c0_i32_1 = arith.constant 0 : i32
    return %arg0, %c0_i32, %c0_i32_0 : i32, i32, i32
  }
}

</mosaic_0001>

<llo_original>
// kernel: tpu_custom_call.1
$region0: #{tpu_custom_call.1}
  #allocation0 [shape = 'u32[]', space=smem, size = 0x4, offset = 0x4, fixed_abs, tag = 'smem constant byte address 0x4 - core index']
  #allocation1 [shape = 'u32[144,128]{1,0:T(1,128)}', space=vmem, size = 0x12000, scoped, tag = 'internal scratch']
  #allocation2 [shape = 'f32[1,1]{1,0:T(1,128)S(6)}', space=smem, size = 0x200, scoped, tag = 'scoped memory for tpu_custom_call.1']
  %s0 = inlined_call_operand.vmem [shape: f32[2,128], index: 0, kind: input, shape index: {}]
  %s1 = inlined_call_operand.hbm [shape: f32[128,256], index: 1, kind: input, shape index: {}]
  %s2 = inlined_call_operand.vmem [shape: f32[1,256], index: 2, kind: input, shape index: {}]
  %s3 = inlined_call_operand.vmem [shape: f32[4,256], index: 3, kind: input, shape index: {}]
  %s4 = inlined_call_operand.<no memory space> [shape: f32[1,1], index: 4, kind: input, shape index: {}]
  %s5 = inlined_call_operand.vmem [shape: f32[1,4,2], index: 5, kind: output, shape index: {}]
  %s6 = sld [smem:[#allocation0]]
  $region34: #{tpu_custom_call.1} parent=0
    _
  %s8 = ssub.s32 1, %s6
  %s9 = scalar_select 0, %s8, %s6
  %10 = sst [smem:[#allocation2]] %s4
  $region1: #{tpu_custom_call.1} parent=0
    #allocation3 [shape = 'u8[131072]{0}', space=vmem, size = 0x20000, scoped, tag = 'input window, operand 1, single buffered']
    #allocation4 [shape = 's32[1]{0}', space=sflag, size = 0x4, scoped, tag = 'scoped memory for tpu_custom_call.1']
    %11 = vsyncpa [#allocation4], 0
    // Predicated region
    $region2: #{tpu_custom_call.1} parent=1 // pred_check
      _
    $region3: #{tpu_custom_call.1} parent=1 // pred_check_branch
      %13 = sbr.rel (0) target = $region5
    $region4: #{tpu_custom_call.1} parent=1 // pred_region
      _
    $region5: #{tpu_custom_call.1} parent=1 // pred_fallthru
      _
    // Predicated region
    $region6: #{tpu_custom_call.1} parent=1 // pred_check
      _
    $region7: #{tpu_custom_call.1} parent=1 // pred_check_branch
      %15 = sbr.rel (0) target = $region9
    $region8: #{tpu_custom_call.1} parent=1 // pred_region
      %s17 = ssub.s32 4096, 4096
      %18 = vsyncadd [#allocation4], %s17
      %s19 = sshll.u32 [#allocation3], 4
      %s20 = int_to_ptr.vmem [resolvable:$true] %s19
      %25 = dma.hbm_to_vmem [thread:$0]  %s1, 4096, %s20, [#allocation4], 256, 256, 16
    $region9: #{tpu_custom_call.1} parent=1 // pred_fallthru
      _
    // Predicated region
    $region10: #{tpu_custom_call.1} parent=1 // pred_check
      _
    $region11: #{tpu_custom_call.1} parent=1 // pred_check_branch
      %27 = sbr.rel (0) target = $region13
    $region12: #{tpu_custom_call.1} parent=1 // pred_region
      _
    $region13: #{tpu_custom_call.1} parent=1 // pred_fallthru
      _
    // Predicated region
    $region14: #{tpu_custom_call.1} parent=1 // pred_check
      _
    $region15: #{tpu_custom_call.1} parent=1 // pred_check_branch
      %29 = sbr.rel (0) target = $region17
    $region16: #{tpu_custom_call.1} parent=1 // pred_region
      _
    $region17: #{tpu_custom_call.1} parent=1 // pred_fallthru
      _
    // Predicated region
    $region18: #{tpu_custom_call.1} parent=1 // pred_check
      _
    $region19: #{tpu_custom_call.1} parent=1 // pred_check_branch
      %31 = sbr.rel (0) target = $region21
    $region20: #{tpu_custom_call.1} parent=1 // pred_region
      _
    $region21: #{tpu_custom_call.1} parent=1 // pred_fallthru
      _
    // Predicated region
    $region22: #{tpu_custom_call.1} parent=1 // pred_check
      _
    $region23: #{tpu_custom_call.1} parent=1 // pred_check_branch
      %33 = sbr.rel (0) target = $region25
    $region24: #{tpu_custom_call.1} parent=1 // pred_region
      %34 = dma.done [#allocation4], 4096
    $region25: #{tpu_custom_call.1} parent=1 // pred_fallthru
      _
    %v35 = vld [vmem:[%s0] sm:$0x3]
    %v36 = vld [vmem:[#allocation3] sm:$0xff]
    %v37 = vld [vmem:[#allocation3 + $0x8] sm:$0xff]
    %v38 = vld [vmem:[#allocation3 + $0x10] sm:$0xff]
    %v39 = vld [vmem:[#allocation3 + $0x18] sm:$0xff]
    %v40 = vld [vmem:[#allocation3 + $0x20] sm:$0xff]
    %v41 = vld [vmem:[#allocation3 + $0x28] sm:$0xff]
    %v42 = vld [vmem:[#allocation3 + $0x30] sm:$0xff]
    %v43 = vld [vmem:[#allocation3 + $0x38] sm:$0xff]
    %v44 = vld [vmem:[#allocation3 + $0x40] sm:$0xff]
    %v45 = vld [vmem:[#allocation3 + $0x48] sm:$0xff]
    %v46 = vld [vmem:[#allocation3 + $0x50] sm:$0xff]
    %v47 = vld [vmem:[#allocation3 + $0x58] sm:$0xff]
    %v48 = vld [vmem:[#allocation3 + $0x60] sm:$0xff]
    %v49 = vld [vmem:[#allocation3 + $0x68] sm:$0xff]
    %v50 = vld [vmem:[#allocation3 + $0x70] sm:$0xff]
    %v51 = vld [vmem:[#allocation3 + $0x78] sm:$0xff]
    %v52 = vld [vmem:[#allocation3 + $0x80] sm:$0xff]
    %v53 = vld [vmem:[#allocation3 + $0x88] sm:$0xff]
    %v54 = vld [vmem:[#allocation3 + $0x90] sm:$0xff]
    %v55 = vld [vmem:[#allocation3 + $0x98] sm:$0xff]
    %v56 = vld [vmem:[#allocation3 + $0xa0] sm:$0xff]
    %v57 = vld [vmem:[#allocation3 + $0xa8] sm:$0xff]
    %v58 = vld [vmem:[#allocation3 + $0xb0] sm:$0xff]
    %v59 = vld [vmem:[#allocation3 + $0xb8] sm:$0xff]
    %v60 = vld [vmem:[#allocation3 + $0xc0] sm:$0xff]
    %v61 = vld [vmem:[#allocation3 + $0xc8] sm:$0xff]
    %v62 = vld [vmem:[#allocation3 + $0xd0] sm:$0xff]
    %v63 = vld [vmem:[#allocation3 + $0xd8] sm:$0xff]
    %v64 = vld [vmem:[#allocation3 + $0xe0] sm:$0xff]
    %v65 = vld [vmem:[#allocation3 + $0xe8] sm:$0xff]
    %v66 = vld [vmem:[#allocation3 + $0xf0] sm:$0xff]
    %v67 = vld [vmem:[#allocation3 + $0xf8] sm:$0xff]
    %v68 = vld [vmem:[%s2] sm:$0x3]
    %v70 = vlaneseq
    %v71 = vshrl.u32 %v70, 7
    %v72 = vsub.s32 0, %v71
    %v73 = vrot.slane %v68, %v72
    %v74 = vlaneseq
    %v75 = vshrl.u32 %v74, 7
    %v76 = vsub.s32 1, %v75
    %v77 = vrot.slane %v68, %v76
    %80 = vmatprep.subr.mxu0 %v37
    %81 = vmatpush1.msra.mxu0 %v36
    %82 = vmatprep.subr.mxu0 %v39
    %83 = vmatpush1.msra.mxu0 %v38
    %84 = vmatprep.subr.mxu0 %v41
    %85 = vmatpush1.msra.mxu0 %v40
    %86 = vmatprep.subr.mxu0 %v43
    %87 = vmatpush1.msra.mxu0 %v42
    %88 = vmatprep.subr.mxu0 %v45
    %89 = vmatpush1.msra.mxu0 %v44
    %90 = vmatprep.subr.mxu0 %v47
    %91 = vmatpush1.msra.mxu0 %v46
    %92 = vmatprep.subr.mxu0 %v49
    %93 = vmatpush1.msra.mxu0 %v48
    %94 = vmatprep.subr.mxu0 %v51
    %95 = vmatpush1.msra.mxu0 %v50
    %96 = vmatprep.subr.mxu0 %v53
    %97 = vmatpush1.msra.mxu0 %v52
    %98 = vmatprep.subr.mxu0 %v55
    %99 = vmatpush1.msra.mxu0 %v54
    %100 = vmatprep.subr.mxu0 %v57
    %101 = vmatpush1.msra.mxu0 %v56
    %102 = vmatprep.subr.mxu0 %v59
    %103 = vmatpush1.msra.mxu0 %v58
    %104 = vmatprep.subr.mxu0 %v61
    %105 = vmatpush1.msra.mxu0 %v60
    %106 = vmatprep.subr.mxu0 %v63
    %107 = vmatpush1.msra.mxu0 %v62
    %108 = vmatprep.subr.mxu0 %v65
    %109 = vmatpush1.msra.mxu0 %v64
    %110 = vmatprep.subr.mxu0 %v67
    %111 = vmatpush1.msra.mxu0 %v66
    %112 = vmatprep.subr.mxu0 0.0
    %113 = vmatpush1.msra.mxu0 0.0
    %114 = vmatprep.subr.mxu0 0.0
    %115 = vmatpush1.msra.mxu0 0.0
    %116 = vmatprep.subr.mxu0 0.0
    %117 = vmatpush1.msra.mxu0 0.0
    %118 = vmatprep.subr.mxu0 0.0
    %119 = vmatpush1.msra.mxu0 0.0
    %120 = vmatprep.subr.mxu0 0.0
    %121 = vmatpush1.msra.mxu0 0.0
    %122 = vmatprep.subr.mxu0 0.0
    %123 = vmatpush1.msra.mxu0 0.0
    %124 = vmatprep.subr.mxu0 0.0
    %125 = vmatpush1.msra.mxu0 0.0
    %126 = vmatprep.subr.mxu0 0.0
    %127 = vmatpush1.msra.mxu0 0.0
    %128 = vmatprep.subr.mxu0 0.0
    %129 = vmatpush1.msra.mxu0 0.0
    %130 = vmatprep.subr.mxu0 0.0
    %131 = vmatpush1.msra.mxu0 0.0
    %132 = vmatprep.subr.mxu0 0.0
    %133 = vmatpush1.msra.mxu0 0.0
    %134 = vmatprep.subr.mxu0 0.0
    %135 = vmatpush1.msra.mxu0 0.0
    %136 = vmatprep.subr.mxu0 0.0
    %137 = vmatpush1.msra.mxu0 0.0
    %138 = vmatprep.subr.mxu0 0.0
    %139 = vmatpush1.msra.mxu0 0.0
    %140 = vmatprep.subr.mxu0 0.0
    %141 = vmatpush1.msra.mxu0 0.0
    %142 = vmatprep.subr.mxu0 0.0
    %143 = vmatpush1.msra.mxu0 0.0
    %144 = vmatprep.mubr.f32.mxu0 0.0
    %145 = vmatmul.mubr.f32.gmra.mrb[0].mxu0 %v35
    %v146 = vpop.f32.mrb[0].mxu0
    %v147 = vadd.f32 %v73, %v146
    %v148 = vpop.f32.mrb[0].mxu0
    %v149 = vadd.f32 %v77, %v148
    %150 = vdwg.mxu0
    %v151 = vmax.f32 %v147, 0.0
    %v152 = vmax.f32 %v149, 0.0
    %v153 = vld [vmem:[%s3] sm:$0xff]
    %s154 = sld [smem:[#allocation2]]
    %v155 = vstv %s154
    %v157 = vcombine.high %v153, %v153
    %159 = vmatprep.subr.mxu0 %v152
    %160 = vmatpush1.xpose.msra.mxu0 %v151
    %161 = vmatprep.subr.mxu0 0.0
    %162 = vmatpush1.xpose.msra.mxu0 0.0
    %163 = vmatprep.subr.mxu0 0.0
    %164 = vmatpush1.xpose.msra.mxu0 0.0
    %165 = vmatprep.subr.mxu0 0.0
    %166 = vmatpush1.xpose.msra.mxu0 0.0
    %167 = vmatprep.subr.mxu0 0.0
    %168 = vmatpush1.xpose.msra.mxu0 0.0
    %169 = vmatprep.subr.mxu0 0.0
    %170 = vmatpush1.xpose.msra.mxu0 0.0
    %171 = vmatprep.subr.mxu0 0.0
    %172 = vmatpush1.xpose.msra.mxu0 0.0
    %173 = vmatprep.subr.mxu0 0.0
    %174 = vmatpush1.xpose.msra.mxu0 0.0
    %175 = vmatprep.subr.mxu0 0.0
    %176 = vmatpush1.xpose.msra.mxu0 0.0
    %177 = vmatprep.subr.mxu0 0.0
    %178 = vmatpush1.xpose.msra.mxu0 0.0
    %179 = vmatprep.subr.mxu0 0.0
    %180 = vmatpush1.xpose.msra.mxu0 0.0
    %181 = vmatprep.subr.mxu0 0.0
    %182 = vmatpush1.xpose.msra.mxu0 0.0
    %183 = vmatprep.subr.mxu0 0.0
    %184 = vmatpush1.xpose.msra.mxu0 0.0
    %185 = vmatprep.subr.mxu0 0.0
    %186 = vmatpush1.xpose.msra.mxu0 0.0
    %187 = vmatprep.subr.mxu0 0.0
    %188 = vmatpush1.xpose.msra.mxu0 0.0
    %189 = vmatprep.subr.mxu0 0.0
    %190 = vmatpush1.xpose.msra.mxu0 0.0
    %191 = vmatprep.subr.mxu0 0.0
    %192 = vmatpush1.xpose.msra.mxu0 0.0
    %193 = vmatprep.subr.mxu0 0.0
    %194 = vmatpush1.xpose.msra.mxu0 0.0
    %195 = vmatprep.subr.mxu0 0.0
    %196 = vmatpush1.xpose.msra.mxu0 0.0
    %197 = vmatprep.subr.mxu0 0.0
    %198 = vmatpush1.xpose.msra.mxu0 0.0
    %199 = vmatprep.subr.mxu0 0.0
    %200 = vmatpush1.xpose.msra.mxu0 0.0
    %201 = vmatprep.subr.mxu0 0.0
    %202 = vmatpush1.xpose.msra.mxu0 0.0
    %203 = vmatprep.subr.mxu0 0.0
    %204 = vmatpush1.xpose.msra.mxu0 0.0
    %205 = vmatprep.subr.mxu0 0.0
    %206 = vmatpush1.xpose.msra.mxu0 0.0
    %207 = vmatprep.subr.mxu0 0.0
    %208 = vmatpush1.xpose.msra.mxu0 0.0
    %209 = vmatprep.subr.mxu0 0.0
    %210 = vmatpush1.xpose.msra.mxu0 0.0
    %211 = vmatprep.subr.mxu0 0.0
    %212 = vmatpush1.xpose.msra.mxu0 0.0
    %213 = vmatprep.subr.mxu0 0.0
    %214 = vmatpush1.xpose.msra.mxu0 0.0
    %215 = vmatprep.subr.mxu0 0.0
    %216 = vmatpush1.xpose.msra.mxu0 0.0
    %217 = vmatprep.subr.mxu0 0.0
    %218 = vmatpush1.xpose.msra.mxu0 0.0
    %219 = vmatprep.subr.mxu0 0.0
    %220 = vmatpush1.xpose.msra.mxu0 0.0
    %221 = vmatprep.subr.mxu0 0.0
    %222 = vmatpush1.xpose.msra.mxu0 0.0
    %223 = vmatprep.mubr.f32.mxu0 %v157
    %224 = vmatmul.mubr.f32.gmra.mrb[0].mxu0 %v153
    %v225 = vpop.f32.mrb[0].mxu0
    %v226 = vadd.f32 %v155, %v225
    %v227 = vpop.f32.mrb[0].mxu0
    %228 = vdwg.mxu0
    %vm229 = vcmask 11264
    %230 = vst.msk [vmem:[%s5] sm:$0xf] %vm229, %v226
    // Predicated region
    $region26: #{tpu_custom_call.1} parent=1 // pred_check
      _
    $region27: #{tpu_custom_call.1} parent=1 // pred_check_branch
      %232 = sbr.rel (0) target = $region29
    $region28: #{tpu_custom_call.1} parent=1 // pred_region
      _
    $region29: #{tpu_custom_call.1} parent=1 // pred_fallthru
      _
    // Predicated region
    $region30: #{tpu_custom_call.1} parent=1 // pred_check
      _
    $region31: #{tpu_custom_call.1} parent=1 // pred_check_branch
      %234 = sbr.rel (0) target = $region33
    $region32: #{tpu_custom_call.1} parent=1 // pred_region
      _
    $region33: #{tpu_custom_call.1} parent=1 // pred_fallthru
      _
    %235 = vsyncpa [#allocation4], 1

</llo_original>
